<compile_context>
chip_gen: v7x
topology: tpu7x:2x2x1
jax: 0.10.0
libtpu: 0.0.40
codegen_flags: <defaults>
</compile_context>

<pallas_src>
import functools

import jax
import jax.numpy as jnp
from jax.experimental import pallas as pl
from jax.experimental.pallas import tpu as pltpu


def _pick_batch_tile(B):
    """Generation-aware batch tile.

    The kernel is dominated by the ~0.35us/grid-step pipeline overhead, not
    compute, so on single-TensorCore chips (v5e/v6e) we never split a small
    batch (B=2 -> bt=2, one step).  On v7x (2 TCs/chip) keep at least two
    'parallel' grid steps when B > 1 so the batch can shard across cores.
    The cap of 32 keeps the padded VMEM working set at ~3 MiB per step.
    """
    if B <= 1:
        return 1
    cap = 32
    try:
        kind = jax.devices()[0].device_kind.lower()
    except Exception:
        kind = ""
    two_tensorcores = ("v7" in kind) or ("7x" in kind)
    if two_tensorcores:
        return max(1, min(cap, -(-B // 2)))   # >= 2 grid steps
    return min(B, cap)


def _transfer_kernel(x_ref, wt_ref, bconv_ref, wfc_ref, bfc_ref, out_ref,
                     xpad_ref, *, H, W, Cin, Cfeat, bt):
    WC = W * Cin

    # Row-pad the tile in VMEM scratch: zero ONLY the two border rows (the
    # interior is fully overwritten right after) with full-lane stores.  The
    # width (padding=1) boundary is baked into the banded conv weight, so no
    # width-padded data and no masked lane-offset stores are ever built.
    zrow = jnp.zeros((bt, 1, WC), jnp.float32)
    xpad_ref[:, 0:1, :] = zrow
    xpad_ref[:, H + 1:H + 2, :] = zrow
    xpad_ref[:, 1:H + 1, :] = x_ref[...]

    # 3x3 conv as three banded matmuls (one per row-shift dy).  Operands keep
    # W*Cin (=64) / W*Cfeat (=512) on the lane axis; the only reshapes merge
    # or split leading (sublane) dims, which are no-cost relayouts.
    acc = jnp.zeros((bt * H, W * Cfeat), jnp.float32)
    for dy in range(3):
        slab = xpad_ref[:, dy:dy + H, :].reshape(bt * H, WC)
        acc = acc + jnp.dot(slab, wt_ref[dy],
                            preferred_element_type=jnp.float32)

    # Conv bias (pre-tiled to W*Cfeat lanes) + ReLU.
    acc = jnp.maximum(acc + bconv_ref[...], 0.0)

    # AdaptiveAvgPool2d((1,1)) + TransferModel.fc, fused: sum over H rows,
    # then one (bt, W*Cfeat) @ (W*Cfeat, n_classes) matmul whose weight was
    # pre-tiled over W and pre-scaled by 1/(H*W) in the wrapper.
    colsum = jnp.sum(acc.reshape(bt, H, W * Cfeat), axis=1)
    logits = jnp.dot(colsum, wfc_ref[...],
                     preferred_element_type=jnp.float32) + bfc_ref[...]
    out_ref[...] = logits.astype(out_ref.dtype)


def transfer_model_forward(x_nchw, conv_w, conv_b, fc_w, fc_b):
    """TransferModel.forward.

    x_nchw : (B, Cin, H, W) float32, PyTorch NCHW layout.
    conv_w : (Cfeat, Cin, 3, 3)   PyTorch Conv2d weight layout.
    conv_b : (Cfeat,)
    fc_w   : (n_classes, Cfeat)   PyTorch Linear weight layout.
    fc_b   : (n_classes,)
    Returns (B, n_classes) float32 logits.
    """
    B, Cin, H, W = x_nchw.shape
    Cfeat = conv_w.shape[0]
    n_classes = fc_w.shape[0]

    bt = _pick_batch_tile(B)
    Bp = int(pl.cdiv(B, bt)) * bt

    # --- weight prep (tiny, one-off) --------------------------------------
    # PyTorch (Cout, Cin, kh, kw) -> (kh, kw, Cin, Cout).
    w_conv = jnp.transpose(conv_w, (2, 3, 1, 0)).astype(jnp.float32)

    # Banded conv weight: for each dy, a (W*Cin, W*Cfeat) matrix so the whole
    # (dx, Cin) contraction of one row-shift is a single lane-dense matmul.
    # sel[dx, w, p] = 1 iff input width index p == w + dx - 1 (padding=1).
    p_idx = jnp.arange(W)
    sel = (p_idx[None, None, :] ==
           (jnp.arange(W)[None, :, None] + jnp.arange(3)[:, None, None] - 1)
           ).astype(jnp.float32)                          # (3, W, W)
    wt = jnp.einsum("xwp,yxcf->ypcwf", sel, w_conv)       # (3, W, Cin, W, Cfeat)
    wt = wt.reshape(3, W * Cin, W * Cfeat)

    bconv_wide = jnp.tile(conv_b.reshape(1, Cfeat).astype(jnp.float32), (1, W))
    # Fuse the 1/(H*W) average pool over W into the fc weight.
    wfc_wide = (jnp.tile(jnp.transpose(fc_w).astype(jnp.float32), (W, 1))
                / float(H * W))                            # (W*Cfeat, n_classes)
    bfc2 = fc_b.reshape(1, n_classes).astype(jnp.float32)

    # --- input prep --------------------------------------------------------
    # NCHW -> (B, H, W*Cin): channels merged onto the lane axis next to W so
    # every in-kernel access is lane-dense (64 lanes instead of 4).  The
    # transpose is the one layout op imposed by the NCHW input contract; at
    # realistic (224x224) sizes accept NHWC input to drop this HBM round-trip.
    x_lanes = jnp.transpose(x_nchw, (0, 2, 3, 1)).reshape(B, H, W * Cin)
    x_lanes = x_lanes.astype(jnp.float32)
    if Bp != B:
        # Only hit when bt does not divide B (never for the default tiles).
        x_lanes = jnp.pad(x_lanes, ((0, Bp - B), (0, 0), (0, 0)))

    kernel = functools.partial(_transfer_kernel, H=H, W=W, Cin=Cin,
                               Cfeat=Cfeat, bt=bt)

    # VMEM per grid step at bt=32 with (8,128) tile padding:
    #   input block  32*16*128*4B = 256 KiB  (x2 pipeline buffers)
    #   banded W     3*64*512*4B  = 384 KiB  (x2)
    #   row-pad scratch 32*24*128*4B = 384 KiB
    #   conv activations 32*16*512*4B = 1 MiB
    # ~3 MiB total -> well under the 32 MiB scoped default everywhere
    # (64 MiB physical on v7x), so no vmem_limit_bytes override needed.
    out = pl.pallas_call(
        kernel,
        out_shape=jax.ShapeDtypeStruct((Bp, n_classes), jnp.float32),
        grid_spec=pltpu.PrefetchScalarGridSpec(
            num_scalar_prefetch=0,
            grid=(Bp // bt,),
            in_specs=[
                pl.BlockSpec((bt, H, W * Cin), lambda i: (i, 0, 0)),
                pl.BlockSpec((3, W * Cin, W * Cfeat), lambda i: (0, 0, 0)),
                pl.BlockSpec((1, W * Cfeat), lambda i: (0, 0)),
                pl.BlockSpec((W * Cfeat, n_classes), lambda i: (0, 0)),
                pl.BlockSpec((1, n_classes), lambda i: (0, 0)),
            ],
            out_specs=pl.BlockSpec((bt, n_classes), lambda i: (i, 0)),
            scratch_shapes=[
                pltpu.VMEM((bt, H + 2, W * Cin), jnp.float32),
            ],
        ),
        compiler_params=pltpu.CompilerParams(
            dimension_semantics=("parallel",)),
    )(x_lanes, wt, bconv_wide, wfc_wide, bfc2)
    return out[:B]


def _reference_forward(x_nchw, conv_w, conv_b, fc_w, fc_b):
    """Pure-JAX reference with identical semantics (for verification)."""
    B, Cin, H, W = x_nchw.shape
    w_conv = jnp.transpose(conv_w, (2, 3, 1, 0))          # (3,3,Cin,Cfeat)
    Cfeat = w_conv.shape[-1]
    x = jnp.transpose(x_nchw, (0, 2, 3, 1))
    xp = jnp.pad(x, ((0, 0), (1, 1), (1, 1), (0, 0)))
    acc = jnp.zeros((B, H, W, Cfeat), jnp.float32)
    for dy in range(3):
        for dx in range(3):
            acc = acc + jnp.einsum("bhwc,cf->bhwf",
                                   xp[:, dy:dy + H, dx:dx + W, :],
                                   w_conv[dy, dx])
    acc = jnp.maximum(acc + conv_b, 0.0)
    pooled = jnp.mean(acc, axis=(1, 2))                   # (B, Cfeat)
    return pooled @ fc_w.T + fc_b


if __name__ == "__main__":
    # Small shapes consistent with the forward: batch=2, Cin=4, 16x16 images,
    # base feature width 32, n_classes=8.
    B, Cin, H, W = 2, 4, 16, 16
    Cfeat, n_classes = 32, 8

    key = jax.random.PRNGKey(0)
    k_x, k_wc, k_bc, k_wf, k_bf = jax.random.split(key, 5)

    x = jax.random.normal(k_x, (B, Cin, H, W), dtype=jnp.float32)

    # Deterministic parameter init (kaiming-uniform-ish), PyTorch layouts.
    fan_conv = Cin * 3 * 3
    conv_w = jax.random.uniform(k_wc, (Cfeat, Cin, 3, 3), jnp.float32,
                                -1.0, 1.0) * (fan_conv ** -0.5)
    conv_b = jax.random.uniform(k_bc, (Cfeat,), jnp.float32,
                                -1.0, 1.0) * (fan_conv ** -0.5)
    fc_w = jax.random.uniform(k_wf, (n_classes, Cfeat), jnp.float32,
                              -1.0, 1.0) * (Cfeat ** -0.5)
    fc_b = jax.random.uniform(k_bf, (n_classes,), jnp.float32,
                              -1.0, 1.0) * (Cfeat ** -0.5)

    out = transfer_model_forward(x, conv_w, conv_b, fc_w, fc_b)
    out = jax.block_until_ready(out)

    ref = _reference_forward(x, conv_w, conv_b, fc_w, fc_b)
    assert out.shape == (B, n_classes)
    assert jnp.allclose(out, ref, atol=1e-4, rtol=1e-4), "mismatch vs reference"

    print("KERNEL_OK")
</pallas_src>

<mosaic_0001>
module attributes {stable_mosaic.version = 11 : i64} {
  func.func @_transfer_kernel(%arg0: i32, %arg1: memref<2x16x64xf32, #tpu.memory_space<vmem>>, %arg2: memref<3x64x512xf32, #tpu.memory_space<vmem>>, %arg3: memref<1x512xf32, #tpu.memory_space<vmem>>, %arg4: memref<512x8xf32, #tpu.memory_space<vmem>>, %arg5: memref<1x8xf32, #tpu.memory_space<vmem>>, %arg6: memref<2x8xf32, #tpu.memory_space<vmem>>, %arg7: memref<2x18x64xf32, #tpu.memory_space<vmem>>) attributes {dimension_semantics = [#tpu.dimension_semantics<parallel>], iteration_bounds = array<i64: 1>, scalar_prefetch = 0 : i64, scratch_operands = 1 : i64, tpu.core_type = #tpu.core_type<tc>, window_params = [{transform_indices = @transform_0, window_bounds = array<i64: 2, 16, 64>}, {pipeline_mode = #tpu.pipeline_mode<synchronous>, transform_indices = @transform_1, window_bounds = array<i64: 3, 64, 512>}, {pipeline_mode = #tpu.pipeline_mode<synchronous>, transform_indices = @transform_2, window_bounds = array<i64: 1, 512>}, {pipeline_mode = #tpu.pipeline_mode<synchronous>, transform_indices = @transform_3, window_bounds = array<i64: 512, 8>}, {pipeline_mode = #tpu.pipeline_mode<synchronous>, transform_indices = @transform_4, window_bounds = array<i64: 1, 8>}, {transform_indices = @transform_5, window_bounds = array<i64: 2, 8>}]} {
    %cst = arith.constant 0.000000e+00 : f32
    %0 = vector.broadcast %cst : f32 to vector<2x1x64xf32>
    %c0 = arith.constant 0 : index
    %c0_0 = arith.constant 0 : index
    %c0_1 = arith.constant 0 : index
    %1 = vector.load %arg7[%c0, %c0_0, %c0_1] : memref<2x18x64xf32, #tpu.memory_space<vmem>>, vector<2x1x64xf32>
    tpu.vector_store %arg7[%c0, %c0_0, %c0_1], %0 {strides = array<i32>} : memref<2x18x64xf32, #tpu.memory_space<vmem>>, vector<2x1x64xf32>,
    %c0_2 = arith.constant 0 : index
    %c17 = arith.constant 17 : index
    %c0_3 = arith.constant 0 : index
    %2 = vector.load %arg7[%c0_2, %c17, %c0_3] : memref<2x18x64xf32, #tpu.memory_space<vmem>>, vector<2x1x64xf32>
    tpu.vector_store %arg7[%c0_2, %c17, %c0_3], %0 {strides = array<i32>} : memref<2x18x64xf32, #tpu.memory_space<vmem>>, vector<2x1x64xf32>,
    %c0_4 = arith.constant 0 : index
    %c0_5 = arith.constant 0 : index
    %c0_6 = arith.constant 0 : index
    %3 = vector.load %arg1[%c0_4, %c0_5, %c0_6] : memref<2x16x64xf32, #tpu.memory_space<vmem>>, vector<2x16x64xf32>
    %c0_7 = arith.constant 0 : index
    %c1 = arith.constant 1 : index
    %c0_8 = arith.constant 0 : index
    %4 = vector.load %arg7[%c0_7, %c1, %c0_8] : memref<2x18x64xf32, #tpu.memory_space<vmem>>, vector<2x16x64xf32>
    tpu.vector_store %arg7[%c0_7, %c1, %c0_8], %3 {strides = array<i32>} : memref<2x18x64xf32, #tpu.memory_space<vmem>>, vector<2x16x64xf32>,
    %cst_9 = arith.constant 0.000000e+00 : f32
    %5 = vector.broadcast %cst_9 : f32 to vector<32x512xf32>
    %c0_10 = arith.constant 0 : index
    %c0_11 = arith.constant 0 : index
    %c0_12 = arith.constant 0 : index
    %6 = vector.load %arg7[%c0_10, %c0_11, %c0_12] : memref<2x18x64xf32, #tpu.memory_space<vmem>>, vector<2x16x64xf32>
    %7 = vector.shape_cast %6 : vector<2x16x64xf32> to vector<32x64xf32>
    %c0_13 = arith.constant 0 : index
    %c0_14 = arith.constant 0 : index
    %c0_15 = arith.constant 0 : index
    %8 = vector.load %arg2[%c0_13, %c0_14, %c0_15] : memref<3x64x512xf32, #tpu.memory_space<vmem>>, vector<1x64x512xf32>
    %9 = vector.shape_cast %8 : vector<1x64x512xf32> to vector<64x512xf32>
    %cst_16 = arith.constant dense<0.000000e+00> : vector<32x512xf32>
    %10 = tpu.matmul %7, %9, %cst_16 {dimension_numbers = #tpu.dot_dimension_numbers<[1], [0], [0], [1], [0, 0, 1, 1], [], []>} : vector<32x64xf32>, vector<64x512xf32>, vector<32x512xf32> -> vector<32x512xf32>
    %11 = arith.addf %5, %10 : vector<32x512xf32>
    %c0_17 = arith.constant 0 : index
    %c1_18 = arith.constant 1 : index
    %c0_19 = arith.constant 0 : index
    %12 = vector.load %arg7[%c0_17, %c1_18, %c0_19] : memref<2x18x64xf32, #tpu.memory_space<vmem>>, vector<2x16x64xf32>
    %13 = vector.shape_cast %12 : vector<2x16x64xf32> to vector<32x64xf32>
    %c1_20 = arith.constant 1 : index
    %c0_21 = arith.constant 0 : index
    %c0_22 = arith.constant 0 : index
    %14 = vector.load %arg2[%c1_20, %c0_21, %c0_22] : memref<3x64x512xf32, #tpu.memory_space<vmem>>, vector<1x64x512xf32>
    %15 = vector.shape_cast %14 : vector<1x64x512xf32> to vector<64x512xf32>
    %cst_23 = arith.constant dense<0.000000e+00> : vector<32x512xf32>
    %16 = tpu.matmul %13, %15, %cst_23 {dimension_numbers = #tpu.dot_dimension_numbers<[1], [0], [0], [1], [0, 0, 1, 1], [], []>} : vector<32x64xf32>, vector<64x512xf32>, vector<32x512xf32> -> vector<32x512xf32>
    %17 = arith.addf %11, %16 : vector<32x512xf32>
    %c0_24 = arith.constant 0 : index
    %c2 = arith.constant 2 : index
    %c0_25 = arith.constant 0 : index
    %18 = vector.load %arg7[%c0_24, %c2, %c0_25] : memref<2x18x64xf32, #tpu.memory_space<vmem>>, vector<2x16x64xf32>
    %19 = vector.shape_cast %18 : vector<2x16x64xf32> to vector<32x64xf32>
    %c2_26 = arith.constant 2 : index
    %c0_27 = arith.constant 0 : index
    %c0_28 = arith.constant 0 : index
    %20 = vector.load %arg2[%c2_26, %c0_27, %c0_28] : memref<3x64x512xf32, #tpu.memory_space<vmem>>, vector<1x64x512xf32>
    %21 = vector.shape_cast %20 : vector<1x64x512xf32> to vector<64x512xf32>
    %cst_29 = arith.constant dense<0.000000e+00> : vector<32x512xf32>
    %22 = tpu.matmul %19, %21, %cst_29 {dimension_numbers = #tpu.dot_dimension_numbers<[1], [0], [0], [1], [0, 0, 1, 1], [], []>} : vector<32x64xf32>, vector<64x512xf32>, vector<32x512xf32> -> vector<32x512xf32>
    %23 = arith.addf %17, %22 : vector<32x512xf32>
    %c0_30 = arith.constant 0 : index
    %c0_31 = arith.constant 0 : index
    %24 = vector.load %arg3[%c0_30, %c0_31] : memref<1x512xf32, #tpu.memory_space<vmem>>, vector<1x512xf32>
    %25 = vector.broadcast %24 : vector<1x512xf32> to vector<32x512xf32>
    %26 = arith.addf %23, %25 : vector<32x512xf32>
    %cst_32 = arith.constant 0.000000e+00 : f32
    %27 = vector.broadcast %cst_32 : f32 to vector<32x512xf32>
    %28 = arith.maximumf %26, %27 : vector<32x512xf32>
    %29 = vector.shape_cast %28 : vector<32x512xf32> to vector<2x16x512xf32>
    %cst_33 = arith.constant dense<0.000000e+00> : vector<2x512xf32>
    %30 = vector.multi_reduction <add>, %29, %cst_33 [1] : vector<2x16x512xf32> to vector<2x512xf32>
    %c0_34 = arith.constant 0 : index
    %c0_35 = arith.constant 0 : index
    %31 = vector.load %arg4[%c0_34, %c0_35] : memref<512x8xf32, #tpu.memory_space<vmem>>, vector<512x8xf32>
    %cst_36 = arith.constant dense<0.000000e+00> : vector<2x8xf32>
    %32 = tpu.matmul %30, %31, %cst_36 {dimension_numbers = #tpu.dot_dimension_numbers<[1], [0], [0], [1], [0, 0, 1, 1], [], []>} : vector<2x512xf32>, vector<512x8xf32>, vector<2x8xf32> -> vector<2x8xf32>
    %c0_37 = arith.constant 0 : index
    %c0_38 = arith.constant 0 : index
    %33 = vector.load %arg5[%c0_37, %c0_38] : memref<1x8xf32, #tpu.memory_space<vmem>>, vector<1x8xf32>
    %34 = vector.broadcast %33 : vector<1x8xf32> to vector<2x8xf32>
    %35 = arith.addf %32, %34 : vector<2x8xf32>
    %c0_39 = arith.constant 0 : index
    %c0_40 = arith.constant 0 : index
    %36 = vector.load %arg6[%c0_39, %c0_40] : memref<2x8xf32, #tpu.memory_space<vmem>>, vector<2x8xf32>
    tpu.vector_store %arg6[%c0_39, %c0_40], %35 {strides = array<i32>} : memref<2x8xf32, #tpu.memory_space<vmem>>, vector<2x8xf32>,
    return
  }
  func.func @transform_0(%arg0: i32) -> (i32, i32, i32) {
    %c0_i32 = arith.constant 0 : i32
    %c0_i32_0 = arith.constant 0 : i32
    %c0_i32_1 = arith.constant 0 : i32
    return %arg0, %c0_i32, %c0_i32_0 : i32, i32, i32
  }
  func.func @transform_1(%arg0: i32) -> (i32, i32, i32) {
    %c0_i32 = arith.constant 0 : i32
    %c0_i32_0 = arith.constant 0 : i32
    %c0_i32_1 = arith.constant 0 : i32
    %c0_i32_2 = arith.constant 0 : i32
    return %c0_i32, %c0_i32_0, %c0_i32_1 : i32, i32, i32
  }
  func.func @transform_2(%arg0: i32) -> (i32, i32) {
    %c0_i32 = arith.constant 0 : i32
    %c0_i32_0 = arith.constant 0 : i32
    %c0_i32_1 = arith.constant 0 : i32
    return %c0_i32, %c0_i32_0 : i32, i32
  }
  func.func @transform_3(%arg0: i32) -> (i32, i32) {
    %c0_i32 = arith.constant 0 : i32
    %c0_i32_0 = arith.constant 0 : i32
    %c0_i32_1 = arith.constant 0 : i32
    return %c0_i32, %c0_i32_0 : i32, i32
  }
  func.func @transform_4(%arg0: i32) -> (i32, i32) {
    %c0_i32 = arith.constant 0 : i32
    %c0_i32_0 = arith.constant 0 : i32
    %c0_i32_1 = arith.constant 0 : i32
    return %c0_i32, %c0_i32_0 : i32, i32
  }
  func.func @transform_5(%arg0: i32) -> (i32, i32) {
    %c0_i32 = arith.constant 0 : i32
    %c0_i32_0 = arith.constant 0 : i32
    return %arg0, %c0_i32 : i32, i32
  }
}

</mosaic_0001>

<llo_original>
// kernel: tpu_custom_call.1
$region0: #{tpu_custom_call.1}
  #allocation0 [shape = 'u32[]', space=smem, size = 0x4, offset = 0x4, fixed_abs, tag = 'smem constant byte address 0x4 - core index']
  #allocation1 [shape = 'u32[144,128]{1,0:T(1,128)}', space=vmem, size = 0x12000, scoped, tag = 'internal scratch']
  #allocation2 [shape = 'f32[2,18,64]{2,1,0:T(8,128)}', space=vmem, size = 0x6000, scoped, tag = 'scratch operand']
  %s0 = inlined_call_operand.vmem [shape: f32[2,16,64], index: 0, kind: input, shape index: {}]
  %s1 = inlined_call_operand.hbm [shape: f32[3,64,512], index: 1, kind: input, shape index: {}]
  %s2 = inlined_call_operand.vmem [shape: f32[1,512], index: 2, kind: input, shape index: {}]
  %s3 = inlined_call_operand.vmem [shape: f32[512,8], index: 3, kind: input, shape index: {}]
  %s4 = inlined_call_operand.vmem [shape: f32[1,8], index: 4, kind: input, shape index: {}]
  %s5 = inlined_call_operand.hbm [shape: f32[2,8], index: 5, kind: output, shape index: {}]
  %s6 = sld [smem:[#allocation0]]
  $region34: #{tpu_custom_call.1} parent=0
    _
  %s8 = ssub.s32 1, %s6
  %s9 = scalar_select 0, %s8, %s6
  $region1: #{tpu_custom_call.1} parent=0
    #allocation3 [shape = 'u8[393216]{0}', space=vmem, size = 0x60000, scoped, tag = 'input window, operand 1, single buffered']
    #allocation4 [shape = 's32[1]{0}', space=sflag, size = 0x4, scoped, tag = 'scoped memory for tpu_custom_call.1']
    #allocation5 [shape = 's32[1]{0}', space=sflag, size = 0x4, scoped, tag = 'scoped memory for tpu_custom_call.1']
    #allocation6 [shape = 'u8[1024]{0}', space=vmem, size = 0x400, scoped, tag = 'output window, operand 0, single buffered']
    %10 = vsyncpa [#allocation4], 0
    %11 = vsyncpa [#allocation5], 0
    // Predicated region
    $region2: #{tpu_custom_call.1} parent=1 // pred_check
      _
    $region3: #{tpu_custom_call.1} parent=1 // pred_check_branch
      %13 = sbr.rel (0) target = $region5
    $region4: #{tpu_custom_call.1} parent=1 // pred_region
      _
    $region5: #{tpu_custom_call.1} parent=1 // pred_fallthru
      _
    // Predicated region
    $region6: #{tpu_custom_call.1} parent=1 // pred_check
      _
    $region7: #{tpu_custom_call.1} parent=1 // pred_check_branch
      %15 = sbr.rel (0) target = $region9
    $region8: #{tpu_custom_call.1} parent=1 // pred_region
      %s17 = ssub.s32 12288, 12288
      %18 = vsyncadd [#allocation4], %s17
      %s19 = sshll.u32 [#allocation3], 4
      %s20 = int_to_ptr.vmem [resolvable:$true] %s19
      %25 = dma.hbm_to_vmem [thread:$0]  %s1, 12288, %s20, [#allocation4], 512, 512, 32
    $region9: #{tpu_custom_call.1} parent=1 // pred_fallthru
      _
    // Predicated region
    $region10: #{tpu_custom_call.1} parent=1 // pred_check
      _
    $region11: #{tpu_custom_call.1} parent=1 // pred_check_branch
      %27 = sbr.rel (0) target = $region13
    $region12: #{tpu_custom_call.1} parent=1 // pred_region
      _
    $region13: #{tpu_custom_call.1} parent=1 // pred_fallthru
      _
    // Predicated region
    $region14: #{tpu_custom_call.1} parent=1 // pred_check
      _
    $region15: #{tpu_custom_call.1} parent=1 // pred_check_branch
      %29 = sbr.rel (0) target = $region17
    $region16: #{tpu_custom_call.1} parent=1 // pred_region
      _
    $region17: #{tpu_custom_call.1} parent=1 // pred_fallthru
      _
    // Predicated region
    $region18: #{tpu_custom_call.1} parent=1 // pred_check
      _
    $region19: #{tpu_custom_call.1} parent=1 // pred_check_branch
      %31 = sbr.rel (0) target = $region21
    $region20: #{tpu_custom_call.1} parent=1 // pred_region
      _
    $region21: #{tpu_custom_call.1} parent=1 // pred_fallthru
      _
    // Predicated region
    $region22: #{tpu_custom_call.1} parent=1 // pred_check
      _
    $region23: #{tpu_custom_call.1} parent=1 // pred_check_branch
      %33 = sbr.rel (0) target = $region25
    $region24: #{tpu_custom_call.1} parent=1 // pred_region
      %34 = dma.done [#allocation4], 12288
    $region25: #{tpu_custom_call.1} parent=1 // pred_fallthru
      _
    %vm35 = vcmask 516096
    %36 = vst.msk [vmem:[#allocation2] sm:$0x1] %vm35, 0.0
    %37 = vst.msk [vmem:[#allocation2 + $0x18] sm:$0x1] %vm35, 0.0
    %38 = vst.msk [vmem:[#allocation2 + $0x11] sm:$0x1] %vm35, 0.0
    %39 = vst.msk [vmem:[#allocation2 + $0x29] sm:$0x1] %vm35, 0.0
    %v40 = vld [vmem:[%s0] sm:$0xff]
    %v41 = vld [vmem:[%s0 + $0x8] sm:$0xff]
    %v42 = vld [vmem:[%s0 + $0x10] sm:$0xff]
    %v43 = vld [vmem:[%s0 + $0x18] sm:$0xff]
    %vm44 = vcmask 523264
    %45 = vst.msk [vmem:[#allocation2 + $0x1] sm:$0xff] %vm44, %v40
    %46 = vst.msk [vmem:[#allocation2 + $0x9] sm:$0xff] %vm44, %v41
    %47 = vst.msk [vmem:[#allocation2 + $0x19] sm:$0xff] %vm44, %v42
    %48 = vst.msk [vmem:[#allocation2 + $0x21] sm:$0xff] %vm44, %v43
    %v49 = vld [vmem:[#allocation2] sm:$0xff]
    %v50 = vld [vmem:[#allocation2 + $0x8] sm:$0xff]
    %v51 = vld [vmem:[#allocation2 + $0x18] sm:$0xff]
    %v52 = vld [vmem:[#allocation2 + $0x20] sm:$0xff]
    %v53 = vld [vmem:[#allocation3] sm:$0xff]
    %v54 = vld [vmem:[#allocation3 + $0x8] sm:$0xff]
    %v55 = vld [vmem:[#allocation3 + $0x10] sm:$0xff]
    %v56 = vld [vmem:[#allocation3 + $0x18] sm:$0xff]
    %v57 = vld [vmem:[#allocation3 + $0x20] sm:$0xff]
    %v58 = vld [vmem:[#allocation3 + $0x28] sm:$0xff]
    %v59 = vld [vmem:[#allocation3 + $0x30] sm:$0xff]
    %v60 = vld [vmem:[#allocation3 + $0x38] sm:$0xff]
    %v61 = vld [vmem:[#allocation3 + $0x40] sm:$0xff]
    %v62 = vld [vmem:[#allocation3 + $0x48] sm:$0xff]
    %v63 = vld [vmem:[#allocation3 + $0x50] sm:$0xff]
    %v64 = vld [vmem:[#allocation3 + $0x58] sm:$0xff]
    %v65 = vld [vmem:[#allocation3 + $0x60] sm:$0xff]
    %v66 = vld [vmem:[#allocation3 + $0x68] sm:$0xff]
    %v67 = vld [vmem:[#allocation3 + $0x70] sm:$0xff]
    %v68 = vld [vmem:[#allocation3 + $0x78] sm:$0xff]
    %v69 = vld [vmem:[#allocation3 + $0x80] sm:$0xff]
    %v70 = vld [vmem:[#allocation3 + $0x88] sm:$0xff]
    %v71 = vld [vmem:[#allocation3 + $0x90] sm:$0xff]
    %v72 = vld [vmem:[#allocation3 + $0x98] sm:$0xff]
    %v73 = vld [vmem:[#allocation3 + $0xa0] sm:$0xff]
    %v74 = vld [vmem:[#allocation3 + $0xa8] sm:$0xff]
    %v75 = vld [vmem:[#allocation3 + $0xb0] sm:$0xff]
    %v76 = vld [vmem:[#allocation3 + $0xb8] sm:$0xff]
    %v77 = vld [vmem:[#allocation3 + $0xc0] sm:$0xff]
    %v78 = vld [vmem:[#allocation3 + $0xc8] sm:$0xff]
    %v79 = vld [vmem:[#allocation3 + $0xd0] sm:$0xff]
    %v80 = vld [vmem:[#allocation3 + $0xd8] sm:$0xff]
    %v81 = vld [vmem:[#allocation3 + $0xe0] sm:$0xff]
    %v82 = vld [vmem:[#allocation3 + $0xe8] sm:$0xff]
    %v83 = vld [vmem:[#allocation3 + $0xf0] sm:$0xff]
    %v84 = vld [vmem:[#allocation3 + $0xf8] sm:$0xff]
    %v85 = vld [vmem:[#allocation2 + $0x1] sm:$0xff]
    %v86 = vld [vmem:[#allocation2 + $0x9] sm:$0xff]
    %v87 = vld [vmem:[#allocation2 + $0x19] sm:$0xff]
    %v88 = vld [vmem:[#allocation2 + $0x21] sm:$0xff]
    %s89 = scalar_lea.vmem [#allocation3], 256
    %v90 = vld [vmem:[%s89] sm:$0xff]
    %v91 = vld [vmem:[%s89 + $0x8] sm:$0xff]
    %v92 = vld [vmem:[%s89 + $0x10] sm:$0xff]
    %v93 = vld [vmem:[%s89 + $0x18] sm:$0xff]
    %v94 = vld [vmem:[%s89 + $0x20] sm:$0xff]
    %v95 = vld [vmem:[%s89 + $0x28] sm:$0xff]
    %v96 = vld [vmem:[%s89 + $0x30] sm:$0xff]
    %v97 = vld [vmem:[%s89 + $0x38] sm:$0xff]
    %v98 = vld [vmem:[%s89 + $0x40] sm:$0xff]
    %v99 = vld [vmem:[%s89 + $0x48] sm:$0xff]
    %v100 = vld [vmem:[%s89 + $0x50] sm:$0xff]
    %v101 = vld [vmem:[%s89 + $0x58] sm:$0xff]
    %v102 = vld [vmem:[%s89 + $0x60] sm:$0xff]
    %v103 = vld [vmem:[%s89 + $0x68] sm:$0xff]
    %v104 = vld [vmem:[%s89 + $0x70] sm:$0xff]
    %v105 = vld [vmem:[%s89 + $0x78] sm:$0xff]
    %v106 = vld [vmem:[%s89 + $0x80] sm:$0xff]
    %v107 = vld [vmem:[%s89 + $0x88] sm:$0xff]
    %v108 = vld [vmem:[%s89 + $0x90] sm:$0xff]
    %v109 = vld [vmem:[%s89 + $0x98] sm:$0xff]
    %v110 = vld [vmem:[%s89 + $0xa0] sm:$0xff]
    %v111 = vld [vmem:[%s89 + $0xa8] sm:$0xff]
    %v112 = vld [vmem:[%s89 + $0xb0] sm:$0xff]
    %v113 = vld [vmem:[%s89 + $0xb8] sm:$0xff]
    %v114 = vld [vmem:[%s89 + $0xc0] sm:$0xff]
    %v115 = vld [vmem:[%s89 + $0xc8] sm:$0xff]
    %v116 = vld [vmem:[%s89 + $0xd0] sm:$0xff]
    %v117 = vld [vmem:[%s89 + $0xd8] sm:$0xff]
    %v118 = vld [vmem:[%s89 + $0xe0] sm:$0xff]
    %v119 = vld [vmem:[%s89 + $0xe8] sm:$0xff]
    %v120 = vld [vmem:[%s89 + $0xf0] sm:$0xff]
    %v121 = vld [vmem:[%s89 + $0xf8] sm:$0xff]
    %v123 = vsel %vm44, %v85, 0
    %v126 = vsel %vm44, %v86, 0
    %v129 = vsel %vm44, %v87, 0
    %v132 = vsel %vm44, %v88, 0
    %134 = vmatprep.subr.mxu0 %v91
    %135 = vmatpush1.msra.mxu0 %v90
    %136 = vmatprep.subr.mxu0 %v95
    %137 = vmatpush1.msra.mxu0 %v94
    %138 = vmatprep.subr.mxu0 %v99
    %139 = vmatpush1.msra.mxu0 %v98
    %140 = vmatprep.subr.mxu0 %v103
    %141 = vmatpush1.msra.mxu0 %v102
    %142 = vmatprep.subr.mxu0 %v107
    %143 = vmatpush1.msra.mxu0 %v106
    %144 = vmatprep.subr.mxu0 %v111
    %145 = vmatpush1.msra.mxu0 %v110
    %146 = vmatprep.subr.mxu0 %v115
    %147 = vmatpush1.msra.mxu0 %v114
    %148 = vmatprep.subr.mxu0 %v119
    %149 = vmatpush1.msra.mxu0 %v118
    %150 = vmatprep.subr.mxu0 0.0
    %151 = vmatpush1.msra.mxu0 0.0
    %152 = vmatprep.subr.mxu0 0.0
    %153 = vmatpush1.msra.mxu0 0.0
    %154 = vmatprep.subr.mxu0 0.0
    %155 = vmatpush1.msra.mxu0 0.0
    %156 = vmatprep.subr.mxu0 0.0
    %157 = vmatpush1.msra.mxu0 0.0
    %158 = vmatprep.subr.mxu0 0.0
    %159 = vmatpush1.msra.mxu0 0.0
    %160 = vmatprep.subr.mxu0 0.0
    %161 = vmatpush1.msra.mxu0 0.0
    %162 = vmatprep.subr.mxu0 0.0
    %163 = vmatpush1.msra.mxu0 0.0
    %164 = vmatprep.subr.mxu0 0.0
    %165 = vmatpush1.msra.mxu0 0.0
    %166 = vmatprep.subr.mxu0 0.0
    %167 = vmatpush1.msra.mxu0 0.0
    %168 = vmatprep.subr.mxu0 0.0
    %169 = vmatpush1.msra.mxu0 0.0
    %170 = vmatprep.subr.mxu0 0.0
    %171 = vmatpush1.msra.mxu0 0.0
    %172 = vmatprep.subr.mxu0 0.0
    %173 = vmatpush1.msra.mxu0 0.0
    %174 = vmatprep.subr.mxu0 0.0
    %175 = vmatpush1.msra.mxu0 0.0
    %176 = vmatprep.subr.mxu0 0.0
    %177 = vmatpush1.msra.mxu0 0.0
    %178 = vmatprep.subr.mxu0 0.0
    %179 = vmatpush1.msra.mxu0 0.0
    %180 = vmatprep.subr.mxu0 0.0
    %181 = vmatpush1.msra.mxu0 0.0
    %182 = vmatprep.subr.mxu0 0.0
    %183 = vmatpush1.msra.mxu0 0.0
    %184 = vmatprep.subr.mxu0 0.0
    %185 = vmatpush1.msra.mxu0 0.0
    %186 = vmatprep.subr.mxu0 0.0
    %187 = vmatpush1.msra.mxu0 0.0
    %188 = vmatprep.subr.mxu0 0.0
    %189 = vmatpush1.msra.mxu0 0.0
    %190 = vmatprep.subr.mxu0 0.0
    %191 = vmatpush1.msra.mxu0 0.0
    %192 = vmatprep.subr.mxu0 0.0
    %193 = vmatpush1.msra.mxu0 0.0
    %194 = vmatprep.subr.mxu0 0.0
    %195 = vmatpush1.msra.mxu0 0.0
    %196 = vmatprep.subr.mxu0 0.0
    %197 = vmatpush1.msra.mxu0 0.0
    %198 = vmatprep.mubr.f32.mxu0 0.0
    %199 = vmatmul.mubr.f32.gmra.mrb[0].mxu0 %v123
    %v200 = vpop.f32.mrb[0].mxu0
    %v201 = vadd.f32 0.0, %v200
    %v202 = vpop.f32.mrb[0].mxu0
    %v203 = vadd.f32 0.0, %v202
    %204 = vmatprep.mubr.f32.mxu0 0.0
    %205 = vmatmul.mubr.f32.gmra.mrb[0].mxu0 %v126
    %v206 = vpop.f32.mrb[0].mxu0
    %v207 = vadd.f32 0.0, %v206
    %v208 = vpop.f32.mrb[0].mxu0
    %v209 = vadd.f32 0.0, %v208
    %210 = vmatprep.mubr.f32.mxu0 0.0
    %211 = vmatmul.mubr.f32.gmra.mrb[0].mxu0 %v129
    %v212 = vpop.f32.mrb[0].mxu0
    %v213 = vadd.f32 0.0, %v212
    %v214 = vpop.f32.mrb[0].mxu0
    %v215 = vadd.f32 0.0, %v214
    %216 = vmatprep.mubr.f32.mxu0 0.0
    %217 = vmatmul.mubr.f32.gmra.mrb[0].mxu0 %v132
    %v218 = vpop.f32.mrb[0].mxu0
    %v219 = vadd.f32 0.0, %v218
    %v220 = vpop.f32.mrb[0].mxu0
    %v221 = vadd.f32 0.0, %v220
    %222 = vdwg.mxu0
    %223 = vmatprep.subr.mxu0 %v93
    %224 = vmatpush1.msra.mxu0 %v92
    %225 = vmatprep.subr.mxu0 %v97
    %226 = vmatpush1.msra.mxu0 %v96
    %227 = vmatprep.subr.mxu0 %v101
    %228 = vmatpush1.msra.mxu0 %v100
    %229 = vmatprep.subr.mxu0 %v105
    %230 = vmatpush1.msra.mxu0 %v104
    %231 = vmatprep.subr.mxu0 %v109
    %232 = vmatpush1.msra.mxu0 %v108
    %233 = vmatprep.subr.mxu0 %v113
    %234 = vmatpush1.msra.mxu0 %v112
    %235 = vmatprep.subr.mxu0 %v117
    %236 = vmatpush1.msra.mxu0 %v116
    %237 = vmatprep.subr.mxu0 %v121
    %238 = vmatpush1.msra.mxu0 %v120
    %239 = vmatprep.subr.mxu0 0.0
    %240 = vmatpush1.msra.mxu0 0.0
    %241 = vmatprep.subr.mxu0 0.0
    %242 = vmatpush1.msra.mxu0 0.0
    %243 = vmatprep.subr.mxu0 0.0
    %244 = vmatpush1.msra.mxu0 0.0
    %245 = vmatprep.subr.mxu0 0.0
    %246 = vmatpush1.msra.mxu0 0.0
    %247 = vmatprep.subr.mxu0 0.0
    %248 = vmatpush1.msra.mxu0 0.0
    %249 = vmatprep.subr.mxu0 0.0
    %250 = vmatpush1.msra.mxu0 0.0
    %251 = vmatprep.subr.mxu0 0.0
    %252 = vmatpush1.msra.mxu0 0.0
    %253 = vmatprep.subr.mxu0 0.0
    %254 = vmatpush1.msra.mxu0 0.0
    %255 = vmatprep.subr.mxu0 0.0
    %256 = vmatpush1.msra.mxu0 0.0
    %257 = vmatprep.subr.mxu0 0.0
    %258 = vmatpush1.msra.mxu0 0.0
    %259 = vmatprep.subr.mxu0 0.0
    %260 = vmatpush1.msra.mxu0 0.0
    %261 = vmatprep.subr.mxu0 0.0
    %262 = vmatpush1.msra.mxu0 0.0
    %263 = vmatprep.subr.mxu0 0.0
    %264 = vmatpush1.msra.mxu0 0.0
    %265 = vmatprep.subr.mxu0 0.0
    %266 = vmatpush1.msra.mxu0 0.0
    %267 = vmatprep.subr.mxu0 0.0
    %268 = vmatpush1.msra.mxu0 0.0
    %269 = vmatprep.subr.mxu0 0.0
    %270 = vmatpush1.msra.mxu0 0.0
    %271 = vmatprep.subr.mxu0 0.0
    %272 = vmatpush1.msra.mxu0 0.0
    %273 = vmatprep.subr.mxu0 0.0
    %274 = vmatpush1.msra.mxu0 0.0
    %275 = vmatprep.subr.mxu0 0.0
    %276 = vmatpush1.msra.mxu0 0.0
    %277 = vmatprep.subr.mxu0 0.0
    %278 = vmatpush1.msra.mxu0 0.0
    %279 = vmatprep.subr.mxu0 0.0
    %280 = vmatpush1.msra.mxu0 0.0
    %281 = vmatprep.subr.mxu0 0.0
    %282 = vmatpush1.msra.mxu0 0.0
    %283 = vmatprep.subr.mxu0 0.0
    %284 = vmatpush1.msra.mxu0 0.0
    %285 = vmatprep.subr.mxu0 0.0
    %286 = vmatpush1.msra.mxu0 0.0
    %287 = vmatprep.mubr.f32.mxu0 0.0
    %288 = vmatmul.mubr.f32.gmra.mrb[0].mxu0 %v123
    %v289 = vpop.f32.mrb[0].mxu0
    %v290 = vadd.f32 0.0, %v289
    %v291 = vpop.f32.mrb[0].mxu0
    %v292 = vadd.f32 0.0, %v291
    %293 = vmatprep.mubr.f32.mxu0 0.0
    %294 = vmatmul.mubr.f32.gmra.mrb[0].mxu0 %v126
    %v295 = vpop.f32.mrb[0].mxu0
    %v296 = vadd.f32 0.0, %v295
    %v297 = vpop.f32.mrb[0].mxu0
    %v298 = vadd.f32 0.0, %v297
    %299 = vmatprep.mubr.f32.mxu0 0.0
    %300 = vmatmul.mubr.f32.gmra.mrb[0].mxu0 %v129
    %v301 = vpop.f32.mrb[0].mxu0
    %v302 = vadd.f32 0.0, %v301
    %v303 = vpop.f32.mrb[0].mxu0
    %v304 = vadd.f32 0.0, %v303
    %305 = vmatprep.mubr.f32.mxu0 0.0
    %306 = vmatmul.mubr.f32.gmra.mrb[0].mxu0 %v132
    %v307 = vpop.f32.mrb[0].mxu0
    %v308 = vadd.f32 0.0, %v307
    %v309 = vpop.f32.mrb[0].mxu0
    %v310 = vadd.f32 0.0, %v309
    %311 = vdwg.mxu0
    %v313 = vsel %vm44, %v49, 0
    %v316 = vsel %vm44, %v50, 0
    %v319 = vsel %vm44, %v51, 0
    %v322 = vsel %vm44, %v52, 0
    %324 = vmatprep.subr.mxu0 %v54
    %325 = vmatpush1.msra.mxu0 %v53
    %326 = vmatprep.subr.mxu0 %v58
    %327 = vmatpush1.msra.mxu0 %v57
    %328 = vmatprep.subr.mxu0 %v62
    %329 = vmatpush1.msra.mxu0 %v61
    %330 = vmatprep.subr.mxu0 %v66
    %331 = vmatpush1.msra.mxu0 %v65
    %332 = vmatprep.subr.mxu0 %v70
    %333 = vmatpush1.msra.mxu0 %v69
    %334 = vmatprep.subr.mxu0 %v74
    %335 = vmatpush1.msra.mxu0 %v73
    %336 = vmatprep.subr.mxu0 %v78
    %337 = vmatpush1.msra.mxu0 %v77
    %338 = vmatprep.subr.mxu0 %v82
    %339 = vmatpush1.msra.mxu0 %v81
    %340 = vmatprep.subr.mxu0 0.0
    %341 = vmatpush1.msra.mxu0 0.0
    %342 = vmatprep.subr.mxu0 0.0
    %343 = vmatpush1.msra.mxu0 0.0
    %344 = vmatprep.subr.mxu0 0.0
    %345 = vmatpush1.msra.mxu0 0.0
    %346 = vmatprep.subr.mxu0 0.0
    %347 = vmatpush1.msra.mxu0 0.0
    %348 = vmatprep.subr.mxu0 0.0
    %349 = vmatpush1.msra.mxu0 0.0
    %350 = vmatprep.subr.mxu0 0.0
    %351 = vmatpush1.msra.mxu0 0.0
    %352 = vmatprep.subr.mxu0 0.0
    %353 = vmatpush1.msra.mxu0 0.0
    %354 = vmatprep.subr.mxu0 0.0
    %355 = vmatpush1.msra.mxu0 0.0
    %356 = vmatprep.subr.mxu0 0.0
    %357 = vmatpush1.msra.mxu0 0.0
    %358 = vmatprep.subr.mxu0 0.0
    %359 = vmatpush1.msra.mxu0 0.0
    %360 = vmatprep.subr.mxu0 0.0
    %361 = vmatpush1.msra.mxu0 0.0
    %362 = vmatprep.subr.mxu0 0.0
    %363 = vmatpush1.msra.mxu0 0.0
    %364 = vmatprep.subr.mxu0 0.0
    %365 = vmatpush1.msra.mxu0 0.0
    %366 = vmatprep.subr.mxu0 0.0
    %367 = vmatpush1.msra.mxu0 0.0
    %368 = vmatprep.subr.mxu0 0.0
    %369 = vmatpush1.msra.mxu0 0.0
    %370 = vmatprep.subr.mxu0 0.0
    %371 = vmatpush1.msra.mxu0 0.0
    %372 = vmatprep.subr.mxu0 0.0
    %373 = vmatpush1.msra.mxu0 0.0
    %374 = vmatprep.subr.mxu0 0.0
    %375 = vmatpush1.msra.mxu0 0.0
    %376 = vmatprep.subr.mxu0 0.0
    %377 = vmatpush1.msra.mxu0 0.0
    %378 = vmatprep.subr.mxu0 0.0
    %379 = vmatpush1.msra.mxu0 0.0
    %380 = vmatprep.subr.mxu0 0.0
    %381 = vmatpush1.msra.mxu0 0.0
    %382 = vmatprep.subr.mxu0 0.0
    %383 = vmatpush1.msra.mxu0 0.0
    %384 = vmatprep.subr.mxu0 0.0
    %385 = vmatpush1.msra.mxu0 0.0
    %386 = vmatprep.subr.mxu0 0.0
    %387 = vmatpush1.msra.mxu0 0.0
    %388 = vmatprep.mubr.f32.mxu0 0.0
    %389 = vmatmul.mubr.f32.gmra.mrb[0].mxu0 %v313
    %v390 = vpop.f32.mrb[0].mxu0
    %v391 = vadd.f32 %v201, %v390
    %v392 = vpop.f32.mrb[0].mxu0
    %v393 = vadd.f32 %v203, %v392
    %394 = vmatprep.mubr.f32.mxu0 0.0
    %395 = vmatmul.mubr.f32.gmra.mrb[0].mxu0 %v316
    %v396 = vpop.f32.mrb[0].mxu0
    %v397 = vadd.f32 %v207, %v396
    %v398 = vpop.f32.mrb[0].mxu0
    %v399 = vadd.f32 %v209, %v398
    %400 = vmatprep.mubr.f32.mxu0 0.0
    %401 = vmatmul.mubr.f32.gmra.mrb[0].mxu0 %v319
    %v402 = vpop.f32.mrb[0].mxu0
    %v403 = vadd.f32 %v213, %v402
    %v404 = vpop.f32.mrb[0].mxu0
    %v405 = vadd.f32 %v215, %v404
    %406 = vmatprep.mubr.f32.mxu0 0.0
    %407 = vmatmul.mubr.f32.gmra.mrb[0].mxu0 %v322
    %v408 = vpop.f32.mrb[0].mxu0
    %v409 = vadd.f32 %v219, %v408
    %v410 = vpop.f32.mrb[0].mxu0
    %v411 = vadd.f32 %v221, %v410
    %412 = vdwg.mxu0
    %413 = vmatprep.subr.mxu0 %v56
    %414 = vmatpush1.msra.mxu0 %v55
    %415 = vmatprep.subr.mxu0 %v60
    %416 = vmatpush1.msra.mxu0 %v59
    %417 = vmatprep.subr.mxu0 %v64
    %418 = vmatpush1.msra.mxu0 %v63
    %419 = vmatprep.subr.mxu0 %v68
    %420 = vmatpush1.msra.mxu0 %v67
    %421 = vmatprep.subr.mxu0 %v72
    %422 = vmatpush1.msra.mxu0 %v71
    %423 = vmatprep.subr.mxu0 %v76
    %424 = vmatpush1.msra.mxu0 %v75
    %425 = vmatprep.subr.mxu0 %v80
    %426 = vmatpush1.msra.mxu0 %v79
    %427 = vmatprep.subr.mxu0 %v84
    %428 = vmatpush1.msra.mxu0 %v83
    %429 = vmatprep.subr.mxu0 0.0
    %430 = vmatpush1.msra.mxu0 0.0
    %431 = vmatprep.subr.mxu0 0.0
    %432 = vmatpush1.msra.mxu0 0.0
    %433 = vmatprep.subr.mxu0 0.0
    %434 = vmatpush1.msra.mxu0 0.0
    %435 = vmatprep.subr.mxu0 0.0
    %436 = vmatpush1.msra.mxu0 0.0
    %437 = vmatprep.subr.mxu0 0.0
    %438 = vmatpush1.msra.mxu0 0.0
    %439 = vmatprep.subr.mxu0 0.0
    %440 = vmatpush1.msra.mxu0 0.0
    %441 = vmatprep.subr.mxu0 0.0
    %442 = vmatpush1.msra.mxu0 0.0
    %443 = vmatprep.subr.mxu0 0.0
    %444 = vmatpush1.msra.mxu0 0.0
    %445 = vmatprep.subr.mxu0 0.0
    %446 = vmatpush1.msra.mxu0 0.0
    %447 = vmatprep.subr.mxu0 0.0
    %448 = vmatpush1.msra.mxu0 0.0
    %449 = vmatprep.subr.mxu0 0.0
    %450 = vmatpush1.msra.mxu0 0.0
    %451 = vmatprep.subr.mxu0 0.0
    %452 = vmatpush1.msra.mxu0 0.0
    %453 = vmatprep.subr.mxu0 0.0
    %454 = vmatpush1.msra.mxu0 0.0
    %455 = vmatprep.subr.mxu0 0.0
    %456 = vmatpush1.msra.mxu0 0.0
    %457 = vmatprep.subr.mxu0 0.0
    %458 = vmatpush1.msra.mxu0 0.0
    %459 = vmatprep.subr.mxu0 0.0
    %460 = vmatpush1.msra.mxu0 0.0
    %461 = vmatprep.subr.mxu0 0.0
    %462 = vmatpush1.msra.mxu0 0.0
    %463 = vmatprep.subr.mxu0 0.0
    %464 = vmatpush1.msra.mxu0 0.0
    %465 = vmatprep.subr.mxu0 0.0
    %466 = vmatpush1.msra.mxu0 0.0
    %467 = vmatprep.subr.mxu0 0.0
    %468 = vmatpush1.msra.mxu0 0.0
    %469 = vmatprep.subr.mxu0 0.0
    %470 = vmatpush1.msra.mxu0 0.0
    %471 = vmatprep.subr.mxu0 0.0
    %472 = vmatpush1.msra.mxu0 0.0
    %473 = vmatprep.subr.mxu0 0.0
    %474 = vmatpush1.msra.mxu0 0.0
    %475 = vmatprep.subr.mxu0 0.0
    %476 = vmatpush1.msra.mxu0 0.0
    %477 = vmatprep.mubr.f32.mxu0 0.0
    %478 = vmatmul.mubr.f32.gmra.mrb[0].mxu0 %v313
    %v479 = vpop.f32.mrb[0].mxu0
    %v480 = vadd.f32 %v290, %v479
    %v481 = vpop.f32.mrb[0].mxu0
    %v482 = vadd.f32 %v292, %v481
    %483 = vmatprep.mubr.f32.mxu0 0.0
    %484 = vmatmul.mubr.f32.gmra.mrb[0].mxu0 %v316
    %v485 = vpop.f32.mrb[0].mxu0
    %v486 = vadd.f32 %v296, %v485
    %v487 = vpop.f32.mrb[0].mxu0
    %v488 = vadd.f32 %v298, %v487
    %489 = vmatprep.mubr.f32.mxu0 0.0
    %490 = vmatmul.mubr.f32.gmra.mrb[0].mxu0 %v319
    %v491 = vpop.f32.mrb[0].mxu0
    %v492 = vadd.f32 %v302, %v491
    %v493 = vpop.f32.mrb[0].mxu0
    %v494 = vadd.f32 %v304, %v493
    %495 = vmatprep.mubr.f32.mxu0 0.0
    %496 = vmatmul.mubr.f32.gmra.mrb[0].mxu0 %v322
    %v497 = vpop.f32.mrb[0].mxu0
    %v498 = vadd.f32 %v308, %v497
    %v499 = vpop.f32.mrb[0].mxu0
    %v500 = vadd.f32 %v310, %v499
    %501 = vdwg.mxu0
    %v502 = vld [vmem:[#allocation2 + $0x2] sm:$0xff]
    %v503 = vld [vmem:[#allocation2 + $0xa] sm:$0xff]
    %v504 = vld [vmem:[#allocation2 + $0x1a] sm:$0xff]
    %v505 = vld [vmem:[#allocation2 + $0x22] sm:$0xff]
    %s506 = scalar_lea.vmem [#allocation3], 512
    %v507 = vld [vmem:[%s506] sm:$0xff]
    %v508 = vld [vmem:[%s506 + $0x8] sm:$0xff]
    %v509 = vld [vmem:[%s506 + $0x10] sm:$0xff]
    %v510 = vld [vmem:[%s506 + $0x18] sm:$0xff]
    %v511 = vld [vmem:[%s506 + $0x20] sm:$0xff]
    %v512 = vld [vmem:[%s506 + $0x28] sm:$0xff]
    %v513 = vld [vmem:[%s506 + $0x30] sm:$0xff]
    %v514 = vld [vmem:[%s506 + $0x38] sm:$0xff]
    %v515 = vld [vmem:[%s506 + $0x40] sm:$0xff]
    %v516 = vld [vmem:[%s506 + $0x48] sm:$0xff]
    %v517 = vld [vmem:[%s506 + $0x50] sm:$0xff]
    %v518 = vld [vmem:[%s506 + $0x58] sm:$0xff]
    %v519 = vld [vmem:[%s506 + $0x60] sm:$0xff]
    %v520 = vld [vmem:[%s506 + $0x68] sm:$0xff]
    %v521 = vld [vmem:[%s506 + $0x70] sm:$0xff]
    %v522 = vld [vmem:[%s506 + $0x78] sm:$0xff]
    %v523 = vld [vmem:[%s506 + $0x80] sm:$0xff]
    %v524 = vld [vmem:[%s506 + $0x88] sm:$0xff]
    %v525 = vld [vmem:[%s506 + $0x90] sm:$0xff]
    %v526 = vld [vmem:[%s506 + $0x98] sm:$0xff]
    %v527 = vld [vmem:[%s506 + $0xa0] sm:$0xff]
    %v528 = vld [vmem:[%s506 + $0xa8] sm:$0xff]
    %v529 = vld [vmem:[%s506 + $0xb0] sm:$0xff]
    %v530 = vld [vmem:[%s506 + $0xb8] sm:$0xff]
    %v531 = vld [vmem:[%s506 + $0xc0] sm:$0xff]
    %v532 = vld [vmem:[%s506 + $0xc8] sm:$0xff]
    %v533 = vld [vmem:[%s506 + $0xd0] sm:$0xff]
    %v534 = vld [vmem:[%s506 + $0xd8] sm:$0xff]
    %v535 = vld [vmem:[%s506 + $0xe0] sm:$0xff]
    %v536 = vld [vmem:[%s506 + $0xe8] sm:$0xff]
    %v537 = vld [vmem:[%s506 + $0xf0] sm:$0xff]
    %v538 = vld [vmem:[%s506 + $0xf8] sm:$0xff]
    %v540 = vsel %vm44, %v502, 0
    %v543 = vsel %vm44, %v503, 0
    %v546 = vsel %vm44, %v504, 0
    %v549 = vsel %vm44, %v505, 0
    %551 = vmatprep.subr.mxu0 %v508
    %552 = vmatpush1.msra.mxu0 %v507
    %553 = vmatprep.subr.mxu0 %v512
    %554 = vmatpush1.msra.mxu0 %v511
    %555 = vmatprep.subr.mxu0 %v516
    %556 = vmatpush1.msra.mxu0 %v515
    %557 = vmatprep.subr.mxu0 %v520
    %558 = vmatpush1.msra.mxu0 %v519
    %559 = vmatprep.subr.mxu0 %v524
    %560 = vmatpush1.msra.mxu0 %v523
    %561 = vmatprep.subr.mxu0 %v528
    %562 = vmatpush1.msra.mxu0 %v527
    %563 = vmatprep.subr.mxu0 %v532
    %564 = vmatpush1.msra.mxu0 %v531
    %565 = vmatprep.subr.mxu0 %v536
    %566 = vmatpush1.msra.mxu0 %v535
    %567 = vmatprep.subr.mxu0 0.0
    %568 = vmatpush1.msra.mxu0 0.0
    %569 = vmatprep.subr.mxu0 0.0
    %570 = vmatpush1.msra.mxu0 0.0
    %571 = vmatprep.subr.mxu0 0.0
    %572 = vmatpush1.msra.mxu0 0.0
    %573 = vmatprep.subr.mxu0 0.0
    %574 = vmatpush1.msra.mxu0 0.0
    %575 = vmatprep.subr.mxu0 0.0
    %576 = vmatpush1.msra.mxu0 0.0
    %577 = vmatprep.subr.mxu0 0.0
    %578 = vmatpush1.msra.mxu0 0.0
    %579 = vmatprep.subr.mxu0 0.0
    %580 = vmatpush1.msra.mxu0 0.0
    %581 = vmatprep.subr.mxu0 0.0
    %582 = vmatpush1.msra.mxu0 0.0
    %583 = vmatprep.subr.mxu0 0.0
    %584 = vmatpush1.msra.mxu0 0.0
    %585 = vmatprep.subr.mxu0 0.0
    %586 = vmatpush1.msra.mxu0 0.0
    %587 = vmatprep.subr.mxu0 0.0
    %588 = vmatpush1.msra.mxu0 0.0
    %589 = vmatprep.subr.mxu0 0.0
    %590 = vmatpush1.msra.mxu0 0.0
    %591 = vmatprep.subr.mxu0 0.0
    %592 = vmatpush1.msra.mxu0 0.0
    %593 = vmatprep.subr.mxu0 0.0
    %594 = vmatpush1.msra.mxu0 0.0
    %595 = vmatprep.subr.mxu0 0.0
    %596 = vmatpush1.msra.mxu0 0.0
    %597 = vmatprep.subr.mxu0 0.0
    %598 = vmatpush1.msra.mxu0 0.0
    %599 = vmatprep.subr.mxu0 0.0
    %600 = vmatpush1.msra.mxu0 0.0
    %601 = vmatprep.subr.mxu0 0.0
    %602 = vmatpush1.msra.mxu0 0.0
    %603 = vmatprep.subr.mxu0 0.0
    %604 = vmatpush1.msra.mxu0 0.0
    %605 = vmatprep.subr.mxu0 0.0
    %606 = vmatpush1.msra.mxu0 0.0
    %607 = vmatprep.subr.mxu0 0.0
    %608 = vmatpush1.msra.mxu0 0.0
    %609 = vmatprep.subr.mxu0 0.0
    %610 = vmatpush1.msra.mxu0 0.0
    %611 = vmatprep.subr.mxu0 0.0
    %612 = vmatpush1.msra.mxu0 0.0
    %613 = vmatprep.subr.mxu0 0.0
    %614 = vmatpush1.msra.mxu0 0.0
    %615 = vmatprep.mubr.f32.mxu0 0.0
    %616 = vmatmul.mubr.f32.gmra.mrb[0].mxu0 %v540
    %v617 = vpop.f32.mrb[0].mxu0
    %v618 = vadd.f32 0.0, %v617
    %v619 = vpop.f32.mrb[0].mxu0
    %v620 = vadd.f32 0.0, %v619
    %621 = vmatprep.mubr.f32.mxu0 0.0
    %622 = vmatmul.mubr.f32.gmra.mrb[0].mxu0 %v543
    %v623 = vpop.f32.mrb[0].mxu0
    %v624 = vadd.f32 0.0, %v623
    %v625 = vpop.f32.mrb[0].mxu0
    %v626 = vadd.f32 0.0, %v625
    %627 = vmatprep.mubr.f32.mxu0 0.0
    %628 = vmatmul.mubr.f32.gmra.mrb[0].mxu0 %v546
    %v629 = vpop.f32.mrb[0].mxu0
    %v630 = vadd.f32 0.0, %v629
    %v631 = vpop.f32.mrb[0].mxu0
    %v632 = vadd.f32 0.0, %v631
    %633 = vmatprep.mubr.f32.mxu0 0.0
    %634 = vmatmul.mubr.f32.gmra.mrb[0].mxu0 %v549
    %v635 = vpop.f32.mrb[0].mxu0
    %v636 = vadd.f32 0.0, %v635
    %v637 = vpop.f32.mrb[0].mxu0
    %v638 = vadd.f32 0.0, %v637
    %639 = vdwg.mxu0
    %640 = vmatprep.subr.mxu0 %v510
    %641 = vmatpush1.msra.mxu0 %v509
    %642 = vmatprep.subr.mxu0 %v514
    %643 = vmatpush1.msra.mxu0 %v513
    %644 = vmatprep.subr.mxu0 %v518
    %645 = vmatpush1.msra.mxu0 %v517
    %646 = vmatprep.subr.mxu0 %v522
    %647 = vmatpush1.msra.mxu0 %v521
    %648 = vmatprep.subr.mxu0 %v526
    %649 = vmatpush1.msra.mxu0 %v525
    %650 = vmatprep.subr.mxu0 %v530
    %651 = vmatpush1.msra.mxu0 %v529
    %652 = vmatprep.subr.mxu0 %v534
    %653 = vmatpush1.msra.mxu0 %v533
    %654 = vmatprep.subr.mxu0 %v538
    %655 = vmatpush1.msra.mxu0 %v537
    %656 = vmatprep.subr.mxu0 0.0
    %657 = vmatpush1.msra.mxu0 0.0
    %658 = vmatprep.subr.mxu0 0.0
    %659 = vmatpush1.msra.mxu0 0.0
    %660 = vmatprep.subr.mxu0 0.0
    %661 = vmatpush1.msra.mxu0 0.0
    %662 = vmatprep.subr.mxu0 0.0
    %663 = vmatpush1.msra.mxu0 0.0
    %664 = vmatprep.subr.mxu0 0.0
    %665 = vmatpush1.msra.mxu0 0.0
    %666 = vmatprep.subr.mxu0 0.0
    %667 = vmatpush1.msra.mxu0 0.0
    %668 = vmatprep.subr.mxu0 0.0
    %669 = vmatpush1.msra.mxu0 0.0
    %670 = vmatprep.subr.mxu0 0.0
    %671 = vmatpush1.msra.mxu0 0.0
    %672 = vmatprep.subr.mxu0 0.0
    %673 = vmatpush1.msra.mxu0 0.0
    %674 = vmatprep.subr.mxu0 0.0
    %675 = vmatpush1.msra.mxu0 0.0
    %676 = vmatprep.subr.mxu0 0.0
    %677 = vmatpush1.msra.mxu0 0.0
    %678 = vmatprep.subr.mxu0 0.0
    %679 = vmatpush1.msra.mxu0 0.0
    %680 = vmatprep.subr.mxu0 0.0
    %681 = vmatpush1.msra.mxu0 0.0
    %682 = vmatprep.subr.mxu0 0.0
    %683 = vmatpush1.msra.mxu0 0.0
    %684 = vmatprep.subr.mxu0 0.0
    %685 = vmatpush1.msra.mxu0 0.0
    %686 = vmatprep.subr.mxu0 0.0
    %687 = vmatpush1.msra.mxu0 0.0
    %688 = vmatprep.subr.mxu0 0.0
    %689 = vmatpush1.msra.mxu0 0.0
    %690 = vmatprep.subr.mxu0 0.0
    %691 = vmatpush1.msra.mxu0 0.0
    %692 = vmatprep.subr.mxu0 0.0
    %693 = vmatpush1.msra.mxu0 0.0
    %694 = vmatprep.subr.mxu0 0.0
    %695 = vmatpush1.msra.mxu0 0.0
    %696 = vmatprep.subr.mxu0 0.0
    %697 = vmatpush1.msra.mxu0 0.0
    %698 = vmatprep.subr.mxu0 0.0
    %699 = vmatpush1.msra.mxu0 0.0
    %700 = vmatprep.subr.mxu0 0.0
    %701 = vmatpush1.msra.mxu0 0.0
    %702 = vmatprep.subr.mxu0 0.0
    %703 = vmatpush1.msra.mxu0 0.0
    %704 = vmatprep.mubr.f32.mxu0 0.0
    %705 = vmatmul.mubr.f32.gmra.mrb[0].mxu0 %v540
    %v706 = vpop.f32.mrb[0].mxu0
    %v707 = vadd.f32 0.0, %v706
    %v708 = vpop.f32.mrb[0].mxu0
    %v709 = vadd.f32 0.0, %v708
    %710 = vmatprep.mubr.f32.mxu0 0.0
    %711 = vmatmul.mubr.f32.gmra.mrb[0].mxu0 %v543
    %v712 = vpop.f32.mrb[0].mxu0
    %v713 = vadd.f32 0.0, %v712
    %v714 = vpop.f32.mrb[0].mxu0
    %v715 = vadd.f32 0.0, %v714
    %716 = vmatprep.mubr.f32.mxu0 0.0
    %717 = vmatmul.mubr.f32.gmra.mrb[0].mxu0 %v546
    %v718 = vpop.f32.mrb[0].mxu0
    %v719 = vadd.f32 0.0, %v718
    %v720 = vpop.f32.mrb[0].mxu0
    %v721 = vadd.f32 0.0, %v720
    %722 = vmatprep.mubr.f32.mxu0 0.0
    %723 = vmatmul.mubr.f32.gmra.mrb[0].mxu0 %v549
    %v724 = vpop.f32.mrb[0].mxu0
    %v725 = vadd.f32 0.0, %v724
    %v726 = vpop.f32.mrb[0].mxu0
    %v727 = vadd.f32 0.0, %v726
    %728 = vdwg.mxu0
    %v729 = vadd.f32 %v391, %v618
    %v730 = vadd.f32 %v393, %v620
    %v731 = vadd.f32 %v480, %v707
    %v732 = vadd.f32 %v482, %v709
    %v733 = vadd.f32 %v397, %v624
    %v734 = vadd.f32 %v399, %v626
    %v735 = vadd.f32 %v486, %v713
    %v736 = vadd.f32 %v488, %v715
    %v737 = vadd.f32 %v403, %v630
    %v738 = vadd.f32 %v405, %v632
    %v739 = vadd.f32 %v492, %v719
    %v740 = vadd.f32 %v494, %v721
    %v741 = vadd.f32 %v409, %v636
    %v742 = vadd.f32 %v411, %v638
    %v743 = vadd.f32 %v498, %v725
    %v744 = vadd.f32 %v500, %v727
    %v745 = vld [vmem:[%s2] sm:$0xf]
    %v747 = vlaneseq
    %v748 = vshrl.u32 %v747, 7
    %v749 = vsub.s32 0, %v748
    %v750 = vrot.slane %v745, %v749
    %v751 = vlaneseq
    %v752 = vshrl.u32 %v751, 7
    %v753 = vsub.s32 1, %v752
    %v754 = vrot.slane %v745, %v753
    %v755 = vlaneseq
    %v756 = vshrl.u32 %v755, 7
    %v757 = vsub.s32 2, %v756
    %v758 = vrot.slane %v745, %v757
    %v759 = vlaneseq
    %v760 = vshrl.u32 %v759, 7
    %v761 = vsub.s32 3, %v760
    %v762 = vrot.slane %v745, %v761
    %v767 = vadd.f32 %v729, %v750
    %v768 = vadd.f32 %v730, %v754
    %v769 = vadd.f32 %v731, %v758
    %v770 = vadd.f32 %v732, %v762
    %v771 = vadd.f32 %v733, %v750
    %v772 = vadd.f32 %v734, %v754
    %v773 = vadd.f32 %v735, %v758
    %v774 = vadd.f32 %v736, %v762
    %v775 = vadd.f32 %v737, %v750
    %v776 = vadd.f32 %v738, %v754
    %v777 = vadd.f32 %v739, %v758
    %v778 = vadd.f32 %v740, %v762
    %v779 = vadd.f32 %v741, %v750
    %v780 = vadd.f32 %v742, %v754
    %v781 = vadd.f32 %v743, %v758
    %v782 = vadd.f32 %v744, %v762
    %v783 = vmax.f32 %v767, 0.0
    %v784 = vmax.f32 %v768, 0.0
    %v785 = vmax.f32 %v769, 0.0
    %v786 = vmax.f32 %v770, 0.0
    %v787 = vmax.f32 %v771, 0.0
    %v788 = vmax.f32 %v772, 0.0
    %v789 = vmax.f32 %v773, 0.0
    %v790 = vmax.f32 %v774, 0.0
    %v791 = vmax.f32 %v775, 0.0
    %v792 = vmax.f32 %v776, 0.0
    %v793 = vmax.f32 %v777, 0.0
    %v794 = vmax.f32 %v778, 0.0
    %v795 = vmax.f32 %v779, 0.0
    %v796 = vmax.f32 %v780, 0.0
    %v797 = vmax.f32 %v781, 0.0
    %v798 = vmax.f32 %v782, 0.0
    %v799 = vadd.f32 %v783, %v787
    %v800 = vrot.slane %v799, 4
    %v801 = vadd.f32 %v799, %v800
    %v802 = vrot.slane %v801, 2
    %v803 = vadd.f32 %v801, %v802
    %v804 = vrot.slane %v803, 1
    %v805 = vadd.f32 %v803, %v804
    %v806 = vadd.f32 %v784, %v788
    %v807 = vrot.slane %v806, 4
    %v808 = vadd.f32 %v806, %v807
    %v809 = vrot.slane %v808, 2
    %v810 = vadd.f32 %v808, %v809
    %v811 = vrot.slane %v810, 1
    %v812 = vadd.f32 %v810, %v811
    %v813 = vadd.f32 %v785, %v789
    %v814 = vrot.slane %v813, 4
    %v815 = vadd.f32 %v813, %v814
    %v816 = vrot.slane %v815, 2
    %v817 = vadd.f32 %v815, %v816
    %v818 = vrot.slane %v817, 1
    %v819 = vadd.f32 %v817, %v818
    %v820 = vadd.f32 %v786, %v790
    %v821 = vrot.slane %v820, 4
    %v822 = vadd.f32 %v820, %v821
    %v823 = vrot.slane %v822, 2
    %v824 = vadd.f32 %v822, %v823
    %v825 = vrot.slane %v824, 1
    %v826 = vadd.f32 %v824, %v825
    %v827 = vadd.f32 %v791, %v795
    %v828 = vrot.slane %v827, 4
    %v829 = vadd.f32 %v827, %v828
    %v830 = vrot.slane %v829, 2
    %v831 = vadd.f32 %v829, %v830
    %v832 = vrot.slane %v831, 1
    %v833 = vadd.f32 %v831, %v832
    %v834 = vadd.f32 %v792, %v796
    %v835 = vrot.slane %v834, 4
    %v836 = vadd.f32 %v834, %v835
    %v837 = vrot.slane %v836, 2
    %v838 = vadd.f32 %v836, %v837
    %v839 = vrot.slane %v838, 1
    %v840 = vadd.f32 %v838, %v839
    %v841 = vadd.f32 %v793, %v797
    %v842 = vrot.slane %v841, 4
    %v843 = vadd.f32 %v841, %v842
    %v844 = vrot.slane %v843, 2
    %v845 = vadd.f32 %v843, %v844
    %v846 = vrot.slane %v845, 1
    %v847 = vadd.f32 %v845, %v846
    %v848 = vadd.f32 %v794, %v798
    %v849 = vrot.slane %v848, 4
    %v850 = vadd.f32 %v848, %v849
    %v851 = vrot.slane %v850, 2
    %v852 = vadd.f32 %v850, %v851
    %v853 = vrot.slane %v852, 1
    %v854 = vadd.f32 %v852, %v853
    %v855 = vld [vmem:[%s3] sm:$0xff]
    %v856 = vld [vmem:[%s3 + $0x8] sm:$0xff]
    %v857 = vld [vmem:[%s3 + $0x10] sm:$0xff]
    %v858 = vld [vmem:[%s3 + $0x18] sm:$0xff]
    %v859 = vld [vmem:[%s3 + $0x20] sm:$0xff]
    %v860 = vld [vmem:[%s3 + $0x28] sm:$0xff]
    %v861 = vld [vmem:[%s3 + $0x30] sm:$0xff]
    %v862 = vld [vmem:[%s3 + $0x38] sm:$0xff]
    %v863 = vld [vmem:[%s3 + $0x40] sm:$0xff]
    %v864 = vld [vmem:[%s3 + $0x48] sm:$0xff]
    %v865 = vld [vmem:[%s3 + $0x50] sm:$0xff]
    %v866 = vld [vmem:[%s3 + $0x58] sm:$0xff]
    %v867 = vld [vmem:[%s3 + $0x60] sm:$0xff]
    %v868 = vld [vmem:[%s3 + $0x68] sm:$0xff]
    %v869 = vld [vmem:[%s3 + $0x70] sm:$0xff]
    %v870 = vld [vmem:[%s3 + $0x78] sm:$0xff]
    %v871 = vld [vmem:[%s3 + $0x80] sm:$0xff]
    %v872 = vld [vmem:[%s3 + $0x88] sm:$0xff]
    %v873 = vld [vmem:[%s3 + $0x90] sm:$0xff]
    %v874 = vld [vmem:[%s3 + $0x98] sm:$0xff]
    %v875 = vld [vmem:[%s3 + $0xa0] sm:$0xff]
    %v876 = vld [vmem:[%s3 + $0xa8] sm:$0xff]
    %v877 = vld [vmem:[%s3 + $0xb0] sm:$0xff]
    %v878 = vld [vmem:[%s3 + $0xb8] sm:$0xff]
    %v879 = vld [vmem:[%s3 + $0xc0] sm:$0xff]
    %v880 = vld [vmem:[%s3 + $0xc8] sm:$0xff]
    %v881 = vld [vmem:[%s3 + $0xd0] sm:$0xff]
    %v882 = vld [vmem:[%s3 + $0xd8] sm:$0xff]
    %v883 = vld [vmem:[%s3 + $0xe0] sm:$0xff]
    %v884 = vld [vmem:[%s3 + $0xe8] sm:$0xff]
    %v885 = vld [vmem:[%s3 + $0xf0] sm:$0xff]
    %v886 = vld [vmem:[%s3 + $0xf8] sm:$0xff]
    %v887 = vld [vmem:[%s3 + $0x100] sm:$0xff]
    %v888 = vld [vmem:[%s3 + $0x108] sm:$0xff]
    %v889 = vld [vmem:[%s3 + $0x110] sm:$0xff]
    %v890 = vld [vmem:[%s3 + $0x118] sm:$0xff]
    %v891 = vld [vmem:[%s3 + $0x120] sm:$0xff]
    %v892 = vld [vmem:[%s3 + $0x128] sm:$0xff]
    %v893 = vld [vmem:[%s3 + $0x130] sm:$0xff]
    %v894 = vld [vmem:[%s3 + $0x138] sm:$0xff]
    %v895 = vld [vmem:[%s3 + $0x140] sm:$0xff]
    %v896 = vld [vmem:[%s3 + $0x148] sm:$0xff]
    %v897 = vld [vmem:[%s3 + $0x150] sm:$0xff]
    %v898 = vld [vmem:[%s3 + $0x158] sm:$0xff]
    %v899 = vld [vmem:[%s3 + $0x160] sm:$0xff]
    %v900 = vld [vmem:[%s3 + $0x168] sm:$0xff]
    %v901 = vld [vmem:[%s3 + $0x170] sm:$0xff]
    %v902 = vld [vmem:[%s3 + $0x178] sm:$0xff]
    %v903 = vld [vmem:[%s3 + $0x180] sm:$0xff]
    %v904 = vld [vmem:[%s3 + $0x188] sm:$0xff]
    %v905 = vld [vmem:[%s3 + $0x190] sm:$0xff]
    %v906 = vld [vmem:[%s3 + $0x198] sm:$0xff]
    %v907 = vld [vmem:[%s3 + $0x1a0] sm:$0xff]
    %v908 = vld [vmem:[%s3 + $0x1a8] sm:$0xff]
    %v909 = vld [vmem:[%s3 + $0x1b0] sm:$0xff]
    %v910 = vld [vmem:[%s3 + $0x1b8] sm:$0xff]
    %v911 = vld [vmem:[%s3 + $0x1c0] sm:$0xff]
    %v912 = vld [vmem:[%s3 + $0x1c8] sm:$0xff]
    %v913 = vld [vmem:[%s3 + $0x1d0] sm:$0xff]
    %v914 = vld [vmem:[%s3 + $0x1d8] sm:$0xff]
    %v915 = vld [vmem:[%s3 + $0x1e0] sm:$0xff]
    %v916 = vld [vmem:[%s3 + $0x1e8] sm:$0xff]
    %v917 = vld [vmem:[%s3 + $0x1f0] sm:$0xff]
    %v918 = vld [vmem:[%s3 + $0x1f8] sm:$0xff]
    %v919 = vld [vmem:[%s4] sm:$0x1]
    %v921 = vlaneseq
    %v922 = vshrl.u32 %v921, 7
    %v923 = vsub.s32 0, %v922
    %v924 = vrot.slane %v919, %v923
    %vm934 = vcmask 1041409
    %v935 = vsel %vm934, %v833, %v805
    %v936 = vsel %vm934, %v840, %v812
    %v937 = vsel %vm934, %v847, %v819
    %v938 = vsel %vm934, %v854, %v826
    %943 = vmatprep.subr.mxu0 0.0
    %944 = vmatpush1.msra.mxu0 %v855
    %945 = vmatprep.subr.mxu0 0.0
    %946 = vmatpush1.msra.mxu0 %v856
    %947 = vmatprep.subr.mxu0 0.0
    %948 = vmatpush1.msra.mxu0 %v857
    %949 = vmatprep.subr.mxu0 0.0
    %950 = vmatpush1.msra.mxu0 %v858
    %951 = vmatprep.subr.mxu0 0.0
    %952 = vmatpush1.msra.mxu0 %v859
    %953 = vmatprep.subr.mxu0 0.0
    %954 = vmatpush1.msra.mxu0 %v860
    %955 = vmatprep.subr.mxu0 0.0
    %956 = vmatpush1.msra.mxu0 %v861
    %957 = vmatprep.subr.mxu0 0.0
    %958 = vmatpush1.msra.mxu0 %v862
    %959 = vmatprep.subr.mxu0 0.0
    %960 = vmatpush1.msra.mxu0 %v863
    %961 = vmatprep.subr.mxu0 0.0
    %962 = vmatpush1.msra.mxu0 %v864
    %963 = vmatprep.subr.mxu0 0.0
    %964 = vmatpush1.msra.mxu0 %v865
    %965 = vmatprep.subr.mxu0 0.0
    %966 = vmatpush1.msra.mxu0 %v866
    %967 = vmatprep.subr.mxu0 0.0
    %968 = vmatpush1.msra.mxu0 %v867
    %969 = vmatprep.subr.mxu0 0.0
    %970 = vmatpush1.msra.mxu0 %v868
    %971 = vmatprep.subr.mxu0 0.0
    %972 = vmatpush1.msra.mxu0 %v869
    %973 = vmatprep.subr.mxu0 0.0
    %974 = vmatpush1.msra.mxu0 %v870
    %975 = vmatprep.subr.mxu0 0.0
    %976 = vmatpush1.msra.mxu0 %v871
    %977 = vmatprep.subr.mxu0 0.0
    %978 = vmatpush1.msra.mxu0 %v872
    %979 = vmatprep.subr.mxu0 0.0
    %980 = vmatpush1.msra.mxu0 %v873
    %981 = vmatprep.subr.mxu0 0.0
    %982 = vmatpush1.msra.mxu0 %v874
    %983 = vmatprep.subr.mxu0 0.0
    %984 = vmatpush1.msra.mxu0 %v875
    %985 = vmatprep.subr.mxu0 0.0
    %986 = vmatpush1.msra.mxu0 %v876
    %987 = vmatprep.subr.mxu0 0.0
    %988 = vmatpush1.msra.mxu0 %v877
    %989 = vmatprep.subr.mxu0 0.0
    %990 = vmatpush1.msra.mxu0 %v878
    %991 = vmatprep.subr.mxu0 0.0
    %992 = vmatpush1.msra.mxu0 %v879
    %993 = vmatprep.subr.mxu0 0.0
    %994 = vmatpush1.msra.mxu0 %v880
    %995 = vmatprep.subr.mxu0 0.0
    %996 = vmatpush1.msra.mxu0 %v881
    %997 = vmatprep.subr.mxu0 0.0
    %998 = vmatpush1.msra.mxu0 %v882
    %999 = vmatprep.subr.mxu0 0.0
    %1000 = vmatpush1.msra.mxu0 %v883
    %1001 = vmatprep.subr.mxu0 0.0
    %1002 = vmatpush1.msra.mxu0 %v884
    %1003 = vmatprep.subr.mxu0 0.0
    %1004 = vmatpush1.msra.mxu0 %v885
    %1005 = vmatprep.subr.mxu0 0.0
    %1006 = vmatpush1.msra.mxu0 %v886
    %1007 = vmatprep.mubr.f32.mxu0 %v936
    %1008 = vmatmul.mubr.f32.gmra.mrb[0].mxu0 %v935
    %v1009 = vpop.f32.mrb[0].mxu0
    %v1010 = vadd.f32 %v924, %v1009
    %v1011 = vpop.f32.mrb[0].mxu0
    %1012 = vdwg.mxu0
    %1013 = vmatprep.subr.mxu0 0.0
    %1014 = vmatpush1.msra.mxu0 %v887
    %1015 = vmatprep.subr.mxu0 0.0
    %1016 = vmatpush1.msra.mxu0 %v888
    %1017 = vmatprep.subr.mxu0 0.0
    %1018 = vmatpush1.msra.mxu0 %v889
    %1019 = vmatprep.subr.mxu0 0.0
    %1020 = vmatpush1.msra.mxu0 %v890
    %1021 = vmatprep.subr.mxu0 0.0
    %1022 = vmatpush1.msra.mxu0 %v891
    %1023 = vmatprep.subr.mxu0 0.0
    %1024 = vmatpush1.msra.mxu0 %v892
    %1025 = vmatprep.subr.mxu0 0.0
    %1026 = vmatpush1.msra.mxu0 %v893
    %1027 = vmatprep.subr.mxu0 0.0
    %1028 = vmatpush1.msra.mxu0 %v894
    %1029 = vmatprep.subr.mxu0 0.0
    %1030 = vmatpush1.msra.mxu0 %v895
    %1031 = vmatprep.subr.mxu0 0.0
    %1032 = vmatpush1.msra.mxu0 %v896
    %1033 = vmatprep.subr.mxu0 0.0
    %1034 = vmatpush1.msra.mxu0 %v897
    %1035 = vmatprep.subr.mxu0 0.0
    %1036 = vmatpush1.msra.mxu0 %v898
    %1037 = vmatprep.subr.mxu0 0.0
    %1038 = vmatpush1.msra.mxu0 %v899
    %1039 = vmatprep.subr.mxu0 0.0
    %1040 = vmatpush1.msra.mxu0 %v900
    %1041 = vmatprep.subr.mxu0 0.0
    %1042 = vmatpush1.msra.mxu0 %v901
    %1043 = vmatprep.subr.mxu0 0.0
    %1044 = vmatpush1.msra.mxu0 %v902
    %1045 = vmatprep.subr.mxu0 0.0
    %1046 = vmatpush1.msra.mxu0 %v903
    %1047 = vmatprep.subr.mxu0 0.0
    %1048 = vmatpush1.msra.mxu0 %v904
    %1049 = vmatprep.subr.mxu0 0.0
    %1050 = vmatpush1.msra.mxu0 %v905
    %1051 = vmatprep.subr.mxu0 0.0
    %1052 = vmatpush1.msra.mxu0 %v906
    %1053 = vmatprep.subr.mxu0 0.0
    %1054 = vmatpush1.msra.mxu0 %v907
    %1055 = vmatprep.subr.mxu0 0.0
    %1056 = vmatpush1.msra.mxu0 %v908
    %1057 = vmatprep.subr.mxu0 0.0
    %1058 = vmatpush1.msra.mxu0 %v909
    %1059 = vmatprep.subr.mxu0 0.0
    %1060 = vmatpush1.msra.mxu0 %v910
    %1061 = vmatprep.subr.mxu0 0.0
    %1062 = vmatpush1.msra.mxu0 %v911
    %1063 = vmatprep.subr.mxu0 0.0
    %1064 = vmatpush1.msra.mxu0 %v912
    %1065 = vmatprep.subr.mxu0 0.0
    %1066 = vmatpush1.msra.mxu0 %v913
    %1067 = vmatprep.subr.mxu0 0.0
    %1068 = vmatpush1.msra.mxu0 %v914
    %1069 = vmatprep.subr.mxu0 0.0
    %1070 = vmatpush1.msra.mxu0 %v915
    %1071 = vmatprep.subr.mxu0 0.0
    %1072 = vmatpush1.msra.mxu0 %v916
    %1073 = vmatprep.subr.mxu0 0.0
    %1074 = vmatpush1.msra.mxu0 %v917
    %1075 = vmatprep.subr.mxu0 0.0
    %1076 = vmatpush1.msra.mxu0 %v918
    %1077 = vmatprep.mubr.f32.mxu0 %v938
    %1078 = vmatmul.mubr.f32.gmra.mrb[0].mxu0 %v937
    %v1079 = vpop.f32.mrb[0].mxu0
    %v1080 = vadd.f32 %v1010, %v1079
    %v1081 = vpop.f32.mrb[0].mxu0
    %1082 = vdwg.mxu0
    %vm1083 = vcmask 58368
    %1084 = vst.msk [vmem:[#allocation6] sm:$0x3] %vm1083, %v1080
    // Predicated region
    $region26: #{tpu_custom_call.1} parent=1 // pred_check
      _
    $region27: #{tpu_custom_call.1} parent=1 // pred_check_branch
      %1086 = sbr.rel (0) target = $region29
    $region28: #{tpu_custom_call.1} parent=1 // pred_region
      %s1088 = ssub.s32 32, 32
      %1089 = vsyncadd [#allocation5], %s1088
      %s1091 = sshll.u32 [#allocation6], 4
      %s1092 = int_to_ptr.vmem [resolvable:$true] %s1091
      %1094 = dma.vmem_to_hbm [thread:$0]  %s1092, 32, %s5, [#allocation5]
    $region29: #{tpu_custom_call.1} parent=1 // pred_fallthru
      _
    // Predicated region
    $region30: #{tpu_custom_call.1} parent=1 // pred_check
      _
    $region31: #{tpu_custom_call.1} parent=1 // pred_check_branch
      %1096 = sbr.rel (0) target = $region33
    $region32: #{tpu_custom_call.1} parent=1 // pred_region
      %1097 = dma.done [#allocation5], 32
    $region33: #{tpu_custom_call.1} parent=1 // pred_fallthru
      _
    %1098 = vsyncpa [#allocation4], 1
    %1099 = vsyncpa [#allocation5], 1

</llo_original>
